<compile_context>
chip_gen: v6e
topology: v6e:2x2x1
jax: 0.10.0
libtpu: 0.0.40
codegen_flags: <defaults>
</compile_context>

<pallas_src>
import functools

import jax
import jax.numpy as jnp
import numpy as np
from jax.experimental import pallas as pl
from jax.experimental.pallas import tpu as pltpu

LANES = 128
MAX_TILE_ROWS = 2048          # 2048 * 128 * 4 B = 1 MiB per f32 block


def _cdiv(a, b):
    return -(-a // b)


def _min_sublane(dtype):
    # Minimum sublane tile: 8 for f32, 16 for bf16, 32 for 8-bit types.
    return max(8, 32 // jnp.dtype(dtype).itemsize)


def _loss_kernel(pos_ref, neg_ref, out_ref, acc_ref, *,
                 pos_blocks, n_pos, n_neg, inv_n_pos, inv_n_neg):
    # pos_ref: VMEM [tr_pos, 128]   one block of the (lane-padded) pos scores
    # neg_ref: VMEM [tr_neg, 128]   one block of the (lane-padded) neg scores
    # out_ref: SMEM f32[1, 1]       scalar total loss (written at last step)
    # acc_ref: VMEM f32[1, 128]     per-lane partial sums, already 1/n-weighted
    i = pl.program_id(0)
    last = pl.num_programs(0) - 1

    @pl.when(i == 0)
    def _():
        acc_ref[...] = jnp.zeros_like(acc_ref)

    def lane_partial(ref, block_idx, n_valid, negate):
        rows, lanes = ref.shape                       # static block shape
        x = ref[...].astype(jnp.float32)              # in-kernel cast (free under DMA)
        if negate:
            x = -x
        # Stable softplus == per-element BCE-with-logits loss.
        sp = jnp.maximum(x, 0.0) + jnp.log1p(jnp.exp(-jnp.abs(x)))
        # Mask the ragged tail: lane-alignment pad and the undefined region of
        # a partial last row-block.  int32 flat index: fine for n < 2^31.
        row_iota = jax.lax.broadcasted_iota(jnp.int32, (rows, lanes), 0)
        lane_iota = jax.lax.broadcasted_iota(jnp.int32, (rows, lanes), 1)
        flat = (block_idx * rows + row_iota) * lanes + lane_iota
        sp = jnp.where(flat < n_valid, sp, 0.0)
        return jnp.sum(sp, axis=0, keepdims=True)     # (1, 128)

    @pl.when(i < pos_blocks)
    def _():
        acc_ref[...] += lane_partial(pos_ref, i, n_pos, True) * inv_n_pos

    @pl.when(i >= pos_blocks)
    def _():
        acc_ref[...] += lane_partial(neg_ref, i - pos_blocks, n_neg, False) * inv_n_neg

    @pl.when(i == last)
    def _():
        out_ref[0, 0] = jnp.sum(acc_ref[...])


def _prep(x):
    """Ravel; pad only the <128-element tail if lane-unaligned; view as (rows, 128)."""
    x = jnp.ravel(x)
    n = x.shape[0]
    if n == 0:
        # Dummy block; the NaN mean (PyTorch semantics) comes from inv_n = NaN.
        return jnp.zeros((8, LANES), x.dtype), 0
    rem = n % LANES
    if rem:
        # TODO(synk): a copy-free ragged-tail path (manual DMA of the last <128
        # elements) would remove this pad pass for lane-unaligned inputs.
        x = jnp.pad(x, (0, LANES - rem))
    return x.reshape(-1, LANES), n


def _tile_rows(rows, max_tile_rows, dtype):
    if rows <= max_tile_rows:
        return rows                                   # full-dim block is always legal
    sub = _min_sublane(dtype)
    return max(sub, (max_tile_rows // sub) * sub)


@functools.partial(jax.jit, static_argnames=("max_tile_rows",))
def link_prediction_loss(pos_score, neg_score, *, max_tile_rows=MAX_TILE_ROWS):
    pos2d, n_pos = _prep(pos_score)
    neg2d, n_neg = _prep(neg_score)

    tr_pos = _tile_rows(pos2d.shape[0], max_tile_rows, pos2d.dtype)
    tr_neg = _tile_rows(neg2d.shape[0], max_tile_rows, neg2d.dtype)
    pos_blocks = _cdiv(pos2d.shape[0], tr_pos)
    neg_blocks = _cdiv(neg2d.shape[0], tr_neg)
    n_blocks = pos_blocks + neg_blocks

    # PyTorch: mean over an empty tensor is NaN -> propagate through 0 * NaN.
    inv_n_pos = (1.0 / n_pos) if n_pos > 0 else float("nan")
    inv_n_neg = (1.0 / n_neg) if n_neg > 0 else float("nan")

    kernel = functools.partial(
        _loss_kernel,
        pos_blocks=pos_blocks,
        n_pos=n_pos,
        n_neg=n_neg,
        inv_n_pos=inv_n_pos,
        inv_n_neg=inv_n_neg,
    )

    out = pl.pallas_call(
        kernel,
        out_shape=jax.ShapeDtypeStruct((1, 1), jnp.float32),
        grid=(n_blocks,),
        in_specs=[
            # During the neg segment, the pos index clamps to its last block
            # (and vice versa), so the inactive input is not re-DMA'd.
            pl.BlockSpec((tr_pos, LANES),
                         lambda i: (jnp.minimum(i, pos_blocks - 1), 0)),
            pl.BlockSpec((tr_neg, LANES),
                         lambda i: (jnp.clip(i - pos_blocks, 0, neg_blocks - 1), 0)),
        ],
        out_specs=pl.BlockSpec(memory_space=pltpu.SMEM),
        scratch_shapes=[pltpu.VMEM((1, LANES), jnp.float32)],
        compiler_params=pltpu.CompilerParams(
            dimension_semantics=("arbitrary",),       # 1-D reduction grid
        ),
    )(pos2d, neg2d)
    return out[0, 0]


def _reference_loss(pos_score, neg_score):
    pos = jnp.ravel(pos_score).astype(jnp.float32)
    neg = jnp.ravel(neg_score).astype(jnp.float32)
    pos_loss = jnp.mean(jnp.maximum(-pos, 0.0) + jnp.log1p(jnp.exp(-jnp.abs(pos))))
    neg_loss = jnp.mean(jnp.maximum(neg, 0.0) + jnp.log1p(jnp.exp(-jnp.abs(neg))))
    return pos_loss + neg_loss


if __name__ == "__main__":
    key = jax.random.PRNGKey(0)
    k1, k2, k3, k4 = jax.random.split(key, 4)

    # Test 1: small, lane-unaligned edge counts (default 1 MiB blocks).
    pos = jax.random.normal(k1, (200,), jnp.float32) * 2.0
    neg = jax.random.normal(k2, (150,), jnp.float32) * 2.0 - 0.5
    out = link_prediction_loss(pos, neg)
    jax.block_until_ready(out)
    np.testing.assert_allclose(np.asarray(out), np.asarray(_reference_loss(pos, neg)),
                               rtol=1e-5, atol=1e-5)

    # Test 2: tiny tile forces multiple + partial blocks per segment, exercising
    # the clamped index_maps and the in-kernel ragged-tail masking.
    pos2 = jax.random.normal(k3, (2000,), jnp.float32)
    neg2 = jax.random.normal(k4, (1500,), jnp.float32) + 0.3
    out2 = link_prediction_loss(pos2, neg2, max_tile_rows=8)
    jax.block_until_ready(out2)
    np.testing.assert_allclose(np.asarray(out2), np.asarray(_reference_loss(pos2, neg2)),
                               rtol=1e-5, atol=1e-5)

    # Test 3: bf16 inputs stream natively; the f32 cast happens inside the kernel.
    pos3 = (jax.random.normal(k1, (200,), jnp.float32) * 2.0).astype(jnp.bfloat16)
    neg3 = (jax.random.normal(k2, (150,), jnp.float32) - 0.5).astype(jnp.bfloat16)
    out3 = link_prediction_loss(pos3, neg3)
    jax.block_until_ready(out3)
    np.testing.assert_allclose(np.asarray(out3), np.asarray(_reference_loss(pos3, neg3)),
                               rtol=1e-4, atol=1e-4)

    print("KERNEL_OK")
</pallas_src>

<mosaic_0001>
module attributes {stable_mosaic.version = 11 : i64} {
  func.func @_loss_kernel(%arg0: i32, %arg1: memref<2x128xf32, #tpu.memory_space<vmem>>, %arg2: memref<2x128xf32, #tpu.memory_space<vmem>>, %arg3: memref<1x1xf32, #tpu.memory_space<smem>>, %arg4: memref<1x128xf32, #tpu.memory_space<vmem>>) attributes {dimension_semantics = [#tpu.dimension_semantics<arbitrary>], iteration_bounds = array<i64: 2>, scalar_prefetch = 0 : i64, scratch_operands = 1 : i64, tpu.core_type = #tpu.core_type<tc>, window_params = [{transform_indices = @transform_0, window_bounds = array<i64: 2, 128>}, {transform_indices = @transform_1, window_bounds = array<i64: 2, 128>}, {transform_indices = @transform_2, window_bounds = array<i64: 1, 1>}]} {
    %c0_i32 = arith.constant 0 : i32
    %0 = arith.cmpi eq, %arg0, %c0_i32 : i32
    %1 = arith.extui %0 : i1 to i32
    %c0_i32_0 = arith.constant 0 : i32
    %2 = arith.cmpi ne, %1, %c0_i32_0 : i32
    scf.if %2 {
      %cst = arith.constant 0.000000e+00 : f32
      %12 = vector.broadcast %cst : f32 to vector<1x128xf32>
      %c0 = arith.constant 0 : index
      %c0_6 = arith.constant 0 : index
      %13 = vector.load %arg4[%c0, %c0_6] : memref<1x128xf32, #tpu.memory_space<vmem>>, vector<1x128xf32>
      tpu.vector_store %arg4[%c0, %c0_6], %12 {strides = array<i32>} : memref<1x128xf32, #tpu.memory_space<vmem>>, vector<1x128xf32>,
    } else {
    }
    %c1_i32 = arith.constant 1 : i32
    %3 = arith.cmpi slt, %arg0, %c1_i32 : i32
    %4 = arith.extui %3 : i1 to i32
    %c0_i32_1 = arith.constant 0 : i32
    %5 = arith.cmpi ne, %4, %c0_i32_1 : i32
    scf.if %5 {
      %c0 = arith.constant 0 : index
      %c0_6 = arith.constant 0 : index
      %12 = vector.load %arg4[%c0, %c0_6] : memref<1x128xf32, #tpu.memory_space<vmem>>, vector<1x128xf32>
      %c0_7 = arith.constant 0 : index
      %c0_8 = arith.constant 0 : index
      %13 = vector.load %arg1[%c0_7, %c0_8] : memref<2x128xf32, #tpu.memory_space<vmem>>, vector<2x128xf32>
      %cst = arith.constant 0.000000e+00 : f32
      %14 = vector.broadcast %cst : f32 to vector<2x128xf32>
      %15 = arith.subf %14, %13 : vector<2x128xf32>
      %cst_9 = arith.constant 0.000000e+00 : f32
      %16 = vector.broadcast %cst_9 : f32 to vector<2x128xf32>
      %17 = arith.maximumf %15, %16 : vector<2x128xf32>
      %18 = math.absf %15 : vector<2x128xf32>
      %cst_10 = arith.constant 0.000000e+00 : f32
      %19 = vector.broadcast %cst_10 : f32 to vector<2x128xf32>
      %20 = arith.subf %19, %18 : vector<2x128xf32>
      %21 = math.exp %20 : vector<2x128xf32>
      %22 = math.log1p %21 : vector<2x128xf32>
      %23 = arith.addf %17, %22 : vector<2x128xf32>
      %24 = tpu.iota {dimensions = array<i32: 0>} : vector<2x128xi32>
      %25 = tpu.iota {dimensions = array<i32: 1>} : vector<2x128xi32>
      %c2_i32 = arith.constant 2 : i32
      %26 = arith.muli %arg0, %c2_i32 : i32
      %27 = vector.broadcast %26 : i32 to vector<2x128xi32>
      %28 = arith.addi %27, %24 : vector<2x128xi32>
      %c128_i32 = arith.constant 128 : i32
      %29 = vector.broadcast %c128_i32 : i32 to vector<2x128xi32>
      %30 = arith.muli %28, %29 : vector<2x128xi32>
      %31 = arith.addi %30, %25 : vector<2x128xi32>
      %c200_i32 = arith.constant 200 : i32
      %32 = vector.broadcast %c200_i32 : i32 to vector<2x128xi32>
      %33 = arith.cmpi slt, %31, %32 : vector<2x128xi32>
      %cst_11 = arith.constant 0.000000e+00 : f32
      %34 = vector.broadcast %cst_11 : f32 to vector<2x128xf32>
      %35 = arith.select %33, %23, %34 : vector<2x128xi1>, vector<2x128xf32>
      %cst_12 = arith.constant dense<0.000000e+00> : vector<128xf32>
      %36 = vector.multi_reduction <add>, %35, %cst_12 [0] : vector<2x128xf32> to vector<128xf32>
      %37 = vector.shape_cast %36 : vector<128xf32> to vector<1x128xf32>
      %cst_13 = arith.constant 5.000000e-03 : f32
      %38 = vector.broadcast %cst_13 : f32 to vector<1x128xf32>
      %39 = arith.mulf %37, %38 : vector<1x128xf32>
      %40 = arith.addf %12, %39 : vector<1x128xf32>
      %c0_14 = arith.constant 0 : index
      %c0_15 = arith.constant 0 : index
      %41 = vector.load %arg4[%c0_14, %c0_15] : memref<1x128xf32, #tpu.memory_space<vmem>>, vector<1x128xf32>
      tpu.vector_store %arg4[%c0_14, %c0_15], %40 {strides = array<i32>} : memref<1x128xf32, #tpu.memory_space<vmem>>, vector<1x128xf32>,
    } else {
    }
    %c1_i32_2 = arith.constant 1 : i32
    %6 = arith.cmpi sge, %arg0, %c1_i32_2 : i32
    %7 = arith.extui %6 : i1 to i32
    %c0_i32_3 = arith.constant 0 : i32
    %8 = arith.cmpi ne, %7, %c0_i32_3 : i32
    scf.if %8 {
      %c0 = arith.constant 0 : index
      %c0_6 = arith.constant 0 : index
      %12 = vector.load %arg4[%c0, %c0_6] : memref<1x128xf32, #tpu.memory_space<vmem>>, vector<1x128xf32>
      %c1_i32_7 = arith.constant 1 : i32
      %13 = arith.subi %arg0, %c1_i32_7 : i32
      %c0_8 = arith.constant 0 : index
      %c0_9 = arith.constant 0 : index
      %14 = vector.load %arg2[%c0_8, %c0_9] : memref<2x128xf32, #tpu.memory_space<vmem>>, vector<2x128xf32>
      %cst = arith.constant 0.000000e+00 : f32
      %15 = vector.broadcast %cst : f32 to vector<2x128xf32>
      %16 = arith.maximumf %14, %15 : vector<2x128xf32>
      %17 = math.absf %14 : vector<2x128xf32>
      %cst_10 = arith.constant 0.000000e+00 : f32
      %18 = vector.broadcast %cst_10 : f32 to vector<2x128xf32>
      %19 = arith.subf %18, %17 : vector<2x128xf32>
      %20 = math.exp %19 : vector<2x128xf32>
      %21 = math.log1p %20 : vector<2x128xf32>
      %22 = arith.addf %16, %21 : vector<2x128xf32>
      %23 = tpu.iota {dimensions = array<i32: 0>} : vector<2x128xi32>
      %24 = tpu.iota {dimensions = array<i32: 1>} : vector<2x128xi32>
      %c2_i32 = arith.constant 2 : i32
      %25 = arith.muli %13, %c2_i32 : i32
      %26 = vector.broadcast %25 : i32 to vector<2x128xi32>
      %27 = arith.addi %26, %23 : vector<2x128xi32>
      %c128_i32 = arith.constant 128 : i32
      %28 = vector.broadcast %c128_i32 : i32 to vector<2x128xi32>
      %29 = arith.muli %27, %28 : vector<2x128xi32>
      %30 = arith.addi %29, %24 : vector<2x128xi32>
      %c150_i32 = arith.constant 150 : i32
      %31 = vector.broadcast %c150_i32 : i32 to vector<2x128xi32>
      %32 = arith.cmpi slt, %30, %31 : vector<2x128xi32>
      %cst_11 = arith.constant 0.000000e+00 : f32
      %33 = vector.broadcast %cst_11 : f32 to vector<2x128xf32>
      %34 = arith.select %32, %22, %33 : vector<2x128xi1>, vector<2x128xf32>
      %cst_12 = arith.constant dense<0.000000e+00> : vector<128xf32>
      %35 = vector.multi_reduction <add>, %34, %cst_12 [0] : vector<2x128xf32> to vector<128xf32>
      %36 = vector.shape_cast %35 : vector<128xf32> to vector<1x128xf32>
      %cst_13 = arith.constant 0.00666666683 : f32
      %37 = vector.broadcast %cst_13 : f32 to vector<1x128xf32>
      %38 = arith.mulf %36, %37 : vector<1x128xf32>
      %39 = arith.addf %12, %38 : vector<1x128xf32>
      %c0_14 = arith.constant 0 : index
      %c0_15 = arith.constant 0 : index
      %40 = vector.load %arg4[%c0_14, %c0_15] : memref<1x128xf32, #tpu.memory_space<vmem>>, vector<1x128xf32>
      tpu.vector_store %arg4[%c0_14, %c0_15], %39 {strides = array<i32>} : memref<1x128xf32, #tpu.memory_space<vmem>>, vector<1x128xf32>,
    } else {
    }
    %c1_i32_4 = arith.constant 1 : i32
    %9 = arith.cmpi eq, %arg0, %c1_i32_4 : i32
    %10 = arith.extui %9 : i1 to i32
    %c0_i32_5 = arith.constant 0 : i32
    %11 = arith.cmpi ne, %10, %c0_i32_5 : i32
    scf.if %11 {
      %c0 = arith.constant 0 : index
      %c0_6 = arith.constant 0 : index
      %12 = vector.load %arg4[%c0, %c0_6] : memref<1x128xf32, #tpu.memory_space<vmem>>, vector<1x128xf32>
      %13 = vector.shape_cast %12 : vector<1x128xf32> to vector<1x1x128xf32>
      %cst = arith.constant dense<0.000000e+00> : vector<1xf32>
      %14 = vector.multi_reduction <add>, %13, %cst [1, 2] : vector<1x1x128xf32> to vector<1xf32>
      %15 = vector.shape_cast %14 : vector<1xf32> to vector<1x1x1xf32>
      %16 = vector.extract %15[0, 0, 0] : f32 from vector<1x1x1xf32>
      %c0_7 = arith.constant 0 : index
      %c0_8 = arith.constant 0 : index
      %17 = memref.load %arg3[%c0_7, %c0_8] : memref<1x1xf32, #tpu.memory_space<smem>>
      memref.store %16, %arg3[%c0_7, %c0_8] : memref<1x1xf32, #tpu.memory_space<smem>>
    } else {
    }
    return
  }
  func.func @transform_0(%arg0: i32) -> (i32, i32) {
    %c0_i32 = arith.constant 0 : i32
    %0 = arith.minsi %arg0, %c0_i32 : i32
    %c0_i32_0 = arith.constant 0 : i32
    %c0_i32_1 = arith.constant 0 : i32
    return %0, %c0_i32_0 : i32, i32
  }
  func.func @transform_1(%arg0: i32) -> (i32, i32) {
    %c1_i32 = arith.constant 1 : i32
    %0 = arith.subi %arg0, %c1_i32 : i32
    %c0_i32 = arith.constant 0 : i32
    %c0_i32_0 = arith.constant 0 : i32
    %1 = arith.maxsi %c0_i32, %0 : i32
    %2 = arith.minsi %c0_i32_0, %1 : i32
    %c0_i32_1 = arith.constant 0 : i32
    %c0_i32_2 = arith.constant 0 : i32
    return %2, %c0_i32_1 : i32, i32
  }
  func.func @transform_2(%arg0: i32) -> (i32, i32) {
    %c0_i32 = arith.constant 0 : i32
    %c0_i32_0 = arith.constant 0 : i32
    %c0_i32_1 = arith.constant 0 : i32
    return %c0_i32, %c0_i32_0 : i32, i32
  }
}

</mosaic_0001>

<llo_original>
// kernel: link_prediction_loss.1
$region0: #{link_prediction_loss.1}
  #allocation0 [shape = 'u32[]', space=smem, size = 0x4, offset = 0x4, fixed_abs, tag = 'smem constant byte address 0x4 - core index']
  #allocation1 [shape = 'u32[144,128]{1,0:T(1,128)}', space=vmem, size = 0x12000, scoped, tag = 'internal scratch']
  #allocation2 [shape = 'f32[1,128]{1,0:T(1,128)}', space=vmem, size = 0x200, scoped, tag = 'scratch operand']
  %s0 = inlined_call_operand.vmem [shape: f32[2,128], index: 0, kind: input, shape index: {}]
  %s1 = inlined_call_operand.vmem [shape: f32[2,128], index: 1, kind: input, shape index: {}]
  %s2 = inlined_call_operand.hbm [shape: f32[1,1], index: 2, kind: output, shape index: {}]
  %s3 = sld [smem:[#allocation0]]
  $region57: #{link_prediction_loss.1} parent=0
    _
  %s5 = ssub.s32 1, %s3
  %s6 = scalar_select 0, %s5, %s3
  $region1: #{link_prediction_loss.1} parent=0
    #allocation3 [shape = 'u8[512]{0}', space=smem, size = 0x200, scoped, tag = 'output window, operand 0, single buffered']
    #allocation4 [shape = 's32[2]{0}', space=sflag, size = 0x8, scoped, tag = 'scoped memory for link_prediction_loss.1']
    %7 = vsyncpa [#allocation4], 0
    loop: start=0, step=1, limit=4
    $region2: #{link_prediction_loss.1} parent=1 // loop_pre_header
      _
    $region3: #{link_prediction_loss.1} parent=1 // loop_header
      %s9 = sphi 0, %s13
      %p10 = scmp.ge.s32.totalorder %s9, 4
      %s23 = sphi 0, %s25
      %s26 = sphi 0, %s23
      %s27 = sphi 0, %s26
      %s43 = sphi 0, %s27
      %s59 = sphi 0, %s61
      %s62 = sphi 0, %s59
      %s63 = sphi 0, %s62
      %s79 = sphi 0, %s63
      %s83 = sphi 0, %s83
      %s85 = sphi 0, %s83
      %s86 = sphi 0, %s85
      %s100 = sphi 0, %s86
    $region4: #{link_prediction_loss.1} parent=1 // loop_header_branch
      %12 = sbr.rel (%p10) target = $region8
    $region5: #{link_prediction_loss.1} parent=1 // loop_body
      %s14 = ssub.s32 %s9, 1
      %s15 = ssub.s32 %s9, 2
      %s16 = sadd.s32 %s9, 1
      %p17 = scmp.lt.s32.totalorder %s9, 0
      %s18 = scalar_select %p17, %s9, 0
      %p19 = scmp.lt.s32.totalorder %s16, 0
      %s20 = scalar_select %p19, %s16, 0
      %s21 = ssub.s32 %s18, %s20
      %p22 = scmp.eq.s32.totalorder %s21, 0
      %s24 = sadd.s32 %s23, 1
      %s25 = scalar_select %p22, %s23, %s24
      %p28 = pneg %p22
      %p29 = scmp.eq.s32.totalorder %s9, 1
      %p30 = por %p28, %p29
      %p31 = scmp.ne.s32.totalorder %s23, %s26
      %p32 = scmp.eq.s32.totalorder %s9, 0
      %p33 = por %p31, %p32
      %p34 = scmp.ne.s32.totalorder %s23, %s26
      %p35 = scmp.eq.s32.totalorder %s14, 1
      %p36 = por %p34, %p35
      %p37 = scmp.ne.s32.totalorder %s26, %s27
      %p38 = scmp.eq.s32.totalorder %s14, 0
      %p39 = por %p37, %p38
      %p40 = scmp.ne.s32.totalorder %s26, %s27
      %p41 = scmp.eq.s32.totalorder %s15, 1
      %p42 = por %p40, %p41
      %p44 = scmp.ne.s32.totalorder %s27, %s43
      %p45 = scmp.eq.s32.totalorder %s15, 0
      %p46 = por %p44, %p45
      %s47 = ssub.s32 %s9, 1
      %p48 = scmp.gt.s32.totalorder %s47, 0
      %s49 = scalar_select %p48, %s47, 0
      %p50 = scmp.lt.s32.totalorder %s49, 0
      %s51 = scalar_select %p50, %s49, 0
      %s52 = ssub.s32 %s16, 1
      %p53 = scmp.gt.s32.totalorder %s52, 0
      %s54 = scalar_select %p53, %s52, 0
      %p55 = scmp.lt.s32.totalorder %s54, 0
      %s56 = scalar_select %p55, %s54, 0
      %s57 = ssub.s32 %s51, %s56
      %p58 = scmp.eq.s32.totalorder %s57, 0
      %s60 = sadd.s32 %s59, 1
      %s61 = scalar_select %p58, %s59, %s60
      %p64 = pneg %p58
      %p65 = scmp.eq.s32.totalorder %s9, 1
      %p66 = por %p64, %p65
      %p67 = scmp.ne.s32.totalorder %s59, %s62
      %p68 = scmp.eq.s32.totalorder %s9, 0
      %p69 = por %p67, %p68
      %p70 = scmp.ne.s32.totalorder %s59, %s62
      %p71 = scmp.eq.s32.totalorder %s14, 1
      %p72 = por %p70, %p71
      %p73 = scmp.ne.s32.totalorder %s62, %s63
      %p74 = scmp.eq.s32.totalorder %s14, 0
      %p75 = por %p73, %p74
      %p76 = scmp.ne.s32.totalorder %s62, %s63
      %p77 = scmp.eq.s32.totalorder %s15, 1
      %p78 = por %p76, %p77
      %p80 = scmp.ne.s32.totalorder %s63, %s79
      %p81 = scmp.eq.s32.totalorder %s15, 0
      %p82 = por %p80, %p81
      %s84 = sadd.s32 %s83, 1
      %p87 = scmp.eq.s32.totalorder %s9, 1
      %p88 = scmp.ne.s32.totalorder %s83, %s85
      %p89 = scmp.eq.s32.totalorder %s9, 0
      %p90 = por %p88, %p89
      %p91 = scmp.ne.s32.totalorder %s83, %s85
      %p92 = scmp.eq.s32.totalorder %s14, 1
      %p93 = por %p91, %p92
      %p94 = scmp.ne.s32.totalorder %s85, %s86
      %p95 = scmp.eq.s32.totalorder %s14, 0
      %p96 = por %p94, %p95
      %p97 = scmp.ne.s32.totalorder %s85, %s86
      %p98 = scmp.eq.s32.totalorder %s15, 1
      %p99 = por %p97, %p98
      %p101 = scmp.ne.s32.totalorder %s86, %s100
      %p102 = scmp.eq.s32.totalorder %s15, 0
      %p103 = por %p101, %p102
      %p104 = scmp.le.s32.totalorder 1, %s9
      %p105 = scmp.lt.s32.totalorder %s9, 3
      %p106 = pnand %p104, %p105
      %p107 = pneg %p106
      // Predicated region
      $region9: #{link_prediction_loss.1} parent=5 // pred_check
        _
      $region10: #{link_prediction_loss.1} parent=5 // pred_check_branch
        %109 = sbr.rel (%p106) target = $region12
      $region11: #{link_prediction_loss.1} parent=5 // pred_region
        %s110 = ssub.s32 %s9, 1
      $region12: #{link_prediction_loss.1} parent=5 // pred_fallthru
        _
      %p111 = scmp.lt.s32.totalorder %s9, 2
      // Predicated region
      $region13: #{link_prediction_loss.1} parent=5 // pred_check
        %p112 = pneg %p111
      $region14: #{link_prediction_loss.1} parent=5 // pred_check_branch
        %114 = sbr.rel (%p112) target = $region16
      $region15: #{link_prediction_loss.1} parent=5 // pred_region
        // Predicated region
        $region17: #{link_prediction_loss.1} parent=15 // pred_check
          %p115 = pneg %p33
        $region18: #{link_prediction_loss.1} parent=15 // pred_check_branch
          %117 = sbr.rel (%p115) target = $region20
        $region19: #{link_prediction_loss.1} parent=15 // pred_region
          %p118 = scmp.lt.s32.totalorder %s9, 0
          %s119 = scalar_select %p118, %s9, 0
          %p120 = scmp.lt.s32.totalorder %s119, 0
          %s121 = scalar_select %p120, %s119, 0
          %s122 = smul.addr %s121, 2
          %s123 = scalar_lea.vmem %s0, %s122
          %p124 = scmp.lt.s32.totalorder %s9, 0
          %s125 = scalar_select %p124, %s9, 0
        $region20: #{link_prediction_loss.1} parent=15 // pred_fallthru
          _
        // Predicated region
        $region21: #{link_prediction_loss.1} parent=15 // pred_check
          %p126 = pneg %p69
        $region22: #{link_prediction_loss.1} parent=15 // pred_check_branch
          %128 = sbr.rel (%p126) target = $region24
        $region23: #{link_prediction_loss.1} parent=15 // pred_region
          %s129 = ssub.s32 %s9, 1
          %p130 = scmp.gt.s32.totalorder %s129, 0
          %s131 = scalar_select %p130, %s129, 0
          %p132 = scmp.lt.s32.totalorder %s131, 0
          %s133 = scalar_select %p132, %s131, 0
          %p134 = scmp.lt.s32.totalorder %s133, 0
          %s135 = scalar_select %p134, %s133, 0
          %s136 = smul.addr %s135, 2
          %s137 = scalar_lea.vmem %s1, %s136
          %s138 = ssub.s32 %s9, 1
          %p139 = scmp.gt.s32.totalorder %s138, 0
          %s140 = scalar_select %p139, %s138, 0
          %p141 = scmp.lt.s32.totalorder %s140, 0
          %s142 = scalar_select %p141, %s140, 0
        $region24: #{link_prediction_loss.1} parent=15 // pred_fallthru
          _
      $region16: #{link_prediction_loss.1} parent=5 // pred_fallthru
        _
      %p143 = scmp.le.s32.totalorder 1, %s9
      %p144 = scmp.lt.s32.totalorder %s9, 3
      %p145 = pnand %p143, %p144
      %p146 = pneg %p145
      // Predicated region
      $region25: #{link_prediction_loss.1} parent=5 // pred_check
        _
      $region26: #{link_prediction_loss.1} parent=5 // pred_check_branch
        %148 = sbr.rel (%p145) target = $region28
      $region27: #{link_prediction_loss.1} parent=5 // pred_region
        %s149 = ssub.s32 %s9, 1
        %p150 = scmp.lt.s32.totalorder %s14, 0
        %s151 = scalar_select %p150, %s14, 0
        %p152 = scmp.lt.s32.totalorder %s151, 0
        %s153 = scalar_select %p152, %s151, 0
        %s154 = smul.addr %s153, 2
        %s155 = scalar_lea.vmem %s0, %s154
        %p156 = pneg %p39
        %p157 = pneg %p36
        %s158 = ssub.s32 %s14, 1
        %p159 = scmp.gt.s32.totalorder %s158, 0
        %s160 = scalar_select %p159, %s158, 0
        %p161 = scmp.lt.s32.totalorder %s160, 0
        %s162 = scalar_select %p161, %s160, 0
        %p163 = scmp.lt.s32.totalorder %s162, 0
        %s164 = scalar_select %p163, %s162, 0
        %s165 = smul.addr %s164, 2
        %s166 = scalar_lea.vmem %s1, %s165
        %p167 = pneg %p75
        %p168 = pneg %p72
        %p169 = pneg %p96
        %p170 = pneg %p93
        %p171 = scmp.lt.s32.totalorder %s14, 0
        %s172 = scalar_select %p171, %s14, 0
        %p173 = scmp.lt.s32.totalorder %s172, 0
        %s174 = scalar_select %p173, %s172, 0
        %s175 = smul.addr %s174, 2
        %s176 = scalar_lea.vmem %s0, %s175
        %p177 = scmp.lt.s32.totalorder %s14, 0
        %s178 = scalar_select %p177, %s14, 0
        %s179 = ssub.s32 %s14, 1
        %p180 = scmp.gt.s32.totalorder %s179, 0
        %s181 = scalar_select %p180, %s179, 0
        %p182 = scmp.lt.s32.totalorder %s181, 0
        %s183 = scalar_select %p182, %s181, 0
        %p184 = scmp.lt.s32.totalorder %s183, 0
        %s185 = scalar_select %p184, %s183, 0
        %s186 = smul.addr %s185, 2
        %s187 = scalar_lea.vmem %s1, %s186
        %s188 = ssub.s32 %s14, 1
        %p189 = scmp.gt.s32.totalorder %s188, 0
        %s190 = scalar_select %p189, %s188, 0
        %p191 = scmp.lt.s32.totalorder %s190, 0
        %s192 = scalar_select %p191, %s190, 0
        %p193 = scmp.eq.s32.totalorder %s14, 0
        // Predicated region
        $region29: #{link_prediction_loss.1} parent=27 // pred_check
          %p194 = pneg %p193
        $region30: #{link_prediction_loss.1} parent=27 // pred_check_branch
          %196 = sbr.rel (%p194) target = $region32
        $region31: #{link_prediction_loss.1} parent=27 // pred_region
          %197 = vst [vmem:[#allocation2] sm:$0x1] 0.0
        $region32: #{link_prediction_loss.1} parent=27 // pred_fallthru
          _
        %p198 = scmp.lt.s32.totalorder %s14, 1
        // Predicated region
        $region33: #{link_prediction_loss.1} parent=27 // pred_check
          %p199 = pneg %p198
        $region34: #{link_prediction_loss.1} parent=27 // pred_check_branch
          %201 = sbr.rel (%p199) target = $region36
        $region35: #{link_prediction_loss.1} parent=27 // pred_region
          %v202 = vld [vmem:[#allocation2] sm:$0x1]
          %v203 = vld [vmem:[%s176] sm:$0x3]
          %v204 = vsub.f32 0.0, %v203
          %v205 = vmax.f32 %v204, 0.0
          %v206 = vand.u32 2147483647, %v204
          %v207 = vsub.f32 0.0, %v206
          %v208 = vmul.f32 %v207, 1.442695
          %v209 = vpow.pop %v208
          %v210 = vadd.f32 %v209, 1.0
          %v211 = vlog2.pop %v210
          %v212 = vmul.f32 %v211, 0.6931472
          %v213 = vmul.f32 -0.5, %v209
          %v214 = vadd.f32 %v213, 1.0
          %v215 = vmul.f32 %v214, %v209
          %v216 = vand.u32 2147483647, %v209
          %vm217 = vcmp.lt.f32.partialorder %v216, 0.0004427343
          %v218 = vsel %vm217, %v215, %v212
          %v219 = vadd.f32 %v205, %v218
          %v220 = vlaneseq
          %v221 = vshrl.u32 %v220, 7
          %v222 = vlaneseq
          %v223 = vand.u32 %v222, 127
          %s224 = smul.u32 %s14, 2
          %v225 = vstv %s224
          %v226 = vadd.s32 %v225, %v221
          %v227 = vmul.u32 %v226, 128
          %v228 = vadd.s32 %v227, %v223
          %vm229 = vcmp.lt.s32.totalorder %v228, 200
          %v230 = vsel %vm229, %v219, 0.0
          %vm231 = vcmask 1041408
          %v232 = vsel %vm231, %v230, 0.0
          %v233 = vrot.slane %v232, 4
          %v234 = vadd.f32 %v232, %v233
          %v235 = vrot.slane %v234, 2
          %v236 = vadd.f32 %v234, %v235
          %v237 = vrot.slane %v236, 1
          %v238 = vadd.f32 %v236, %v237
          %v239 = vmul.f32 %v238, 0.005
          %v240 = vadd.f32 %v202, %v239
          %241 = vst [vmem:[#allocation2] sm:$0x1] %v240
        $region36: #{link_prediction_loss.1} parent=27 // pred_fallthru
          _
        %p242 = scmp.ge.s32.totalorder %s14, 1
        // Predicated region
        $region37: #{link_prediction_loss.1} parent=27 // pred_check
          %p243 = pneg %p242
        $region38: #{link_prediction_loss.1} parent=27 // pred_check_branch
          %245 = sbr.rel (%p243) target = $region40
        $region39: #{link_prediction_loss.1} parent=27 // pred_region
          %v246 = vld [vmem:[#allocation2] sm:$0x1]
          %s247 = ssub.s32 %s14, 1
          %v248 = vld [vmem:[%s187] sm:$0x3]
          %v249 = vmax.f32 %v248, 0.0
          %v250 = vand.u32 2147483647, %v248
          %v251 = vsub.f32 0.0, %v250
          %v252 = vmul.f32 %v251, 1.442695
          %v253 = vpow.pop %v252
          %v254 = vadd.f32 %v253, 1.0
          %v255 = vlog2.pop %v254
          %v256 = vmul.f32 %v255, 0.6931472
          %v257 = vmul.f32 -0.5, %v253
          %v258 = vadd.f32 %v257, 1.0
          %v259 = vmul.f32 %v258, %v253
          %v260 = vand.u32 2147483647, %v253
          %vm261 = vcmp.lt.f32.partialorder %v260, 0.0004427343
          %v262 = vsel %vm261, %v259, %v256
          %v263 = vadd.f32 %v249, %v262
          %v264 = vlaneseq
          %v265 = vshrl.u32 %v264, 7
          %v266 = vlaneseq
          %v267 = vand.u32 %v266, 127
          %s268 = smul.u32 %s247, 2
          %v269 = vstv %s268
          %v270 = vadd.s32 %v269, %v265
          %v271 = vmul.u32 %v270, 128
          %v272 = vadd.s32 %v271, %v267
          %vm273 = vcmp.lt.s32.totalorder %v272, 150
          %v274 = vsel %vm273, %v263, 0.0
          %vm275 = vcmask 1041408
          %v276 = vsel %vm275, %v274, 0.0
          %v277 = vrot.slane %v276, 4
          %v278 = vadd.f32 %v276, %v277
          %v279 = vrot.slane %v278, 2
          %v280 = vadd.f32 %v278, %v279
          %v281 = vrot.slane %v280, 1
          %v282 = vadd.f32 %v280, %v281
          %v283 = vmul.f32 %v282, 0.006666667
          %v284 = vadd.f32 %v246, %v283
          %285 = vst [vmem:[#allocation2] sm:$0x1] %v284
        $region40: #{link_prediction_loss.1} parent=27 // pred_fallthru
          _
        %p286 = scmp.eq.s32.totalorder %s14, 1
        // Predicated region
        $region41: #{link_prediction_loss.1} parent=27 // pred_check
          %p287 = pneg %p286
        $region42: #{link_prediction_loss.1} parent=27 // pred_check_branch
          %289 = sbr.rel (%p287) target = $region44
        $region43: #{link_prediction_loss.1} parent=27 // pred_region
          %v290 = vld [vmem:[#allocation2] sm:$0x1]
          %vm291 = vcmask 1040384
          %v292 = vsel %vm291, %v290, 0.0
          %293 = vadd.xlane.f32.xlu0 %v292
          %v294 = vpop.xlane.xlu0 %293
          %v295 = vrot.slane %v294, 4
          %v296 = vadd.f32 %v294, %v295
          %v297 = vrot.slane %v296, 2
          %v298 = vadd.f32 %v296, %v297
          %v299 = vrot.slane %v298, 1
          %v300 = vadd.f32 %v298, %v299
          %s301 = vtos %v300
          %s302 = scalar_lea.smem [#allocation3], 0
          %303 = sst [smem:[%s302]] %s301
        $region44: #{link_prediction_loss.1} parent=27 // pred_fallthru
          _
        // Predicated region
        $region45: #{link_prediction_loss.1} parent=27 // pred_check
          %p304 = pneg %p93
        $region46: #{link_prediction_loss.1} parent=27 // pred_check_branch
          %306 = sbr.rel (%p304) target = $region48
        $region47: #{link_prediction_loss.1} parent=27 // pred_region
          %s308 = ssub.s32 16, 16
          %309 = vsyncadd [#allocation4], %s308
          %312 = dma.smem_to_hbm [#allocation3], 16, %s2, [#allocation4]
        $region48: #{link_prediction_loss.1} parent=27 // pred_fallthru
          _
        // Predicated region
        $region49: #{link_prediction_loss.1} parent=27 // pred_check
          %p313 = pneg %p93
        $region50: #{link_prediction_loss.1} parent=27 // pred_check_branch
          %315 = sbr.rel (%p313) target = $region52
        $region51: #{link_prediction_loss.1} parent=27 // pred_region
          %316 = dma.done [#allocation4], 16
        $region52: #{link_prediction_loss.1} parent=27 // pred_fallthru
          _
        %317 = sfence
      $region28: #{link_prediction_loss.1} parent=5 // pred_fallthru
        _
      %p318 = scmp.le.s32.totalorder 2, %s9
      // Predicated region
      $region53: #{link_prediction_loss.1} parent=5 // pred_check
        %p319 = pneg %p318
      $region54: #{link_prediction_loss.1} parent=5 // pred_check_branch
        %321 = sbr.rel (%p319) target = $region56
      $region55: #{link_prediction_loss.1} parent=5 // pred_region
        %s322 = ssub.s32 %s9, 2
      $region56: #{link_prediction_loss.1} parent=5 // pred_fallthru
        _
    $region6: #{link_prediction_loss.1} parent=1 // loop_footer
      %s13 = sadd.s32 1, %s9
    $region7: #{link_prediction_loss.1} parent=1 // loop_footer_branch
      %8 = sbr.rel target = $region3
    $region8: #{link_prediction_loss.1} parent=1 // loop_exit
      _
    %323 = vsyncpa [#allocation4], 1
    %s324 = scalar_lea.sflag [#allocation4], 1
    %325 = vsyncpa %s324, 1

</llo_original>
